<compile_context>
chip_gen: v7x
topology: tpu7x:2x2x1
jax: 0.10.0
libtpu: 0.0.40
codegen_flags: <defaults>
</compile_context>

<pallas_src>
import jax
import jax.numpy as jnp
from jax import lax
from jax.experimental import pallas as pl
from jax.experimental.pallas import tpu as pltpu


# ---------------------------------------------------------------------------
# Shared GRU-step math (values, not refs).
# ---------------------------------------------------------------------------
def _gru_step(x, h_prev, w1, b1, w_ih, b_i, w_hh, b_hn):
    """fc1+relu+GRUCell.  x: (B, Din), h_prev: (B, H) f32 -> h_new (B, H) f32."""
    H = h_prev.shape[-1]

    # fc1: relu(x @ W1 + b1)   (concat done in the wrapper)
    h1 = jnp.maximum(
        jnp.dot(x.astype(w1.dtype), w1, preferred_element_type=jnp.float32) + b1,
        0.0)

    # GRU: two fused 3H gate matmuls, r/z biases pre-merged into b_i.
    gi = jnp.dot(h1.astype(w_ih.dtype), w_ih,
                 preferred_element_type=jnp.float32) + b_i
    gh = jnp.dot(h_prev.astype(w_hh.dtype), w_hh,
                 preferred_element_type=jnp.float32)

    r = jax.nn.sigmoid(gi[:, :H] + gh[:, :H])
    z = jax.nn.sigmoid(gi[:, H:2 * H] + gh[:, H:2 * H])
    n = jnp.tanh(gi[:, 2 * H:] + r * (gh[:, 2 * H:] + b_hn))
    return (1.0 - z) * n + z * h_prev


# ---------------------------------------------------------------------------
# Single-step kernel (matches DRQNAgent.forward exactly; q padded to 128).
# ---------------------------------------------------------------------------
def drqn_step_kernel(x_ref, h0_ref, w1_ref, b1_ref, wih_ref, bi_ref,
                     whh_ref, bhn_ref, w2_ref, b2_ref, q_ref, h_ref):
    h_new = _gru_step(x_ref[...], h0_ref[...],
                      w1_ref[...], b1_ref[...], wih_ref[...], bi_ref[...],
                      whh_ref[...], bhn_ref[...])
    q = jnp.dot(h_new.astype(w2_ref.dtype), w2_ref[...],
                preferred_element_type=jnp.float32) + b2_ref[...]
    q_ref[...] = q
    h_ref[...] = h_new


def drqn_forward(obs, prev_action, hidden, kp):
    """Single forward step; whole model fits VMEM -> no grid.

    Note: calling this once per environment step re-DMAs the weights and pays
    full launch overhead each call — prefer drqn_rollout for repeated steps.
    """
    B = obs.shape[0]
    H = hidden.shape[1]
    A = kp["n_actions"]
    A_pad = kp["w2"].shape[1]
    mdt = kp["w1"].dtype

    x = jnp.concatenate([obs, prev_action], axis=-1).astype(mdt)
    args = (x, hidden.astype(jnp.float32),
            kp["w1"], kp["b1"], kp["w_ih"], kp["b_i"],
            kp["w_hh"], kp["b_hn"], kp["w2"], kp["b2"])

    vmem = pl.BlockSpec(memory_space=pltpu.MemorySpace.VMEM)
    q_pad, h_new = pl.pallas_call(
        drqn_step_kernel,
        out_shape=(
            jax.ShapeDtypeStruct((B, A_pad), jnp.float32),
            jax.ShapeDtypeStruct((B, H), jnp.float32),
        ),
        in_specs=[vmem] * len(args),
        out_specs=(vmem, vmem),
    )(*args)
    return q_pad[:, :A], h_new


# ---------------------------------------------------------------------------
# Rollout kernel: single grid point, T recurrent steps via unrolled fori_loop,
# everything VMEM-resident, one lane-dense fc2 + store at the end.
# ---------------------------------------------------------------------------
def drqn_rollout_kernel(x_ref, h0_ref, w1_ref, b1_ref, wih_ref, bi_ref,
                        whh_ref, bhn_ref, w2_ref, b2_ref,
                        q_ref, h_ref, hseq_ref):
    T, B, _ = x_ref.shape
    H = h0_ref.shape[1]

    # Hoist loop-invariant loads and bias broadcasts out of the loop
    # (JAX does not CSE broadcast_in_dim).
    w1 = w1_ref[...]
    w_ih = wih_ref[...]
    w_hh = whh_ref[...]
    b1 = jnp.broadcast_to(b1_ref[...], (B, w1.shape[1]))
    b_i = jnp.broadcast_to(bi_ref[...], (B, w_ih.shape[1]))
    b_hn = jnp.broadcast_to(bhn_ref[...], (B, H))

    def step(t, h_prev):
        h_new = _gru_step(x_ref[t], h_prev, w1, b1, w_ih, b_i, w_hh, b_hn)
        row = t * B
        if B % 8 == 0:
            row = pl.multiple_of(row, 8)
        hseq_ref[pl.ds(row, B), :] = h_new
        return h_new

    h_last = lax.fori_loop(0, T, step, h0_ref[...], unroll=True)

    # Deferred fc2: one (T*B, H) @ (H, A_pad>=128) matmul, one lane-dense store.
    w2 = w2_ref[...]
    q_ref[...] = jnp.dot(hseq_ref[...].astype(w2.dtype), w2,
                         preferred_element_type=jnp.float32) + b2_ref[...]
    h_ref[...] = h_last


def drqn_rollout(obs_seq, act_seq, h0, kp):
    """Apply DRQNAgent.forward for t = 0..T-1, carrying h on-chip."""
    T, B = obs_seq.shape[:2]
    H = h0.shape[1]
    A = kp["n_actions"]
    A_pad = kp["w2"].shape[1]
    mdt = kp["w1"].dtype

    x_seq = jnp.concatenate([obs_seq, act_seq], axis=-1).astype(mdt)
    args = (x_seq, h0.astype(jnp.float32),
            kp["w1"], kp["b1"], kp["w_ih"], kp["b_i"],
            kp["w_hh"], kp["b_hn"], kp["w2"], kp["b2"])

    # TODO(synk): for much larger T*B, switch to pltpu.emit_pipeline over
    # T-chunks (v7x has only 64 MiB VMEM) and add a "parallel" batch-tile grid
    # axis so v7x's second TensorCore gets a batch shard.
    vmem = pl.BlockSpec(memory_space=pltpu.MemorySpace.VMEM)
    q_flat, h_final = pl.pallas_call(
        drqn_rollout_kernel,
        out_shape=(
            jax.ShapeDtypeStruct((T * B, A_pad), jnp.float32),
            jax.ShapeDtypeStruct((B, H), jnp.float32),
        ),
        in_specs=[vmem] * len(args),
        out_specs=(vmem, vmem),
        scratch_shapes=[pltpu.VMEM((T * B, H), jnp.float32)],
    )(*args)
    return q_flat.reshape(T, B, A_pad)[:, :, :A], h_final


# ---------------------------------------------------------------------------
# Parameters (PyTorch-shaped) + packing into the fused kernel layout.
# ---------------------------------------------------------------------------
def init_torch_params(key, obs_dim, action_dim, hidden_dim):
    """Synthetic init with PyTorch tensor shapes."""
    ks = jax.random.split(key, 8)
    in_dim = obs_dim + action_dim
    H = hidden_dim

    def u(k, shape, fan_in):
        bound = 1.0 / jnp.sqrt(jnp.float32(fan_in))
        return jax.random.uniform(k, shape, jnp.float32, -bound, bound)

    return {
        "fc1_w": u(ks[0], (H, in_dim), in_dim),      # nn.Linear(in_dim, H)
        "fc1_b": u(ks[1], (H,), in_dim),
        "gru_w_ih": u(ks[2], (3 * H, H), H),         # GRUCell weight_ih (r,z,n)
        "gru_b_ih": u(ks[3], (3 * H,), H),
        "gru_w_hh": u(ks[4], (3 * H, H), H),         # GRUCell weight_hh
        "gru_b_hh": u(ks[5], (3 * H,), H),
        "fc2_w": u(ks[6], (action_dim, H), H),       # nn.Linear(H, action_dim)
        "fc2_b": u(ks[7], (action_dim,), H),
    }


def pack_params(tp, matmul_dtype=jnp.bfloat16, recurrent_dtype=jnp.float32):
    """Transpose/fuse/merge-bias/pad once in the wrapper; cast MXU operands.

    W_hh stays in `recurrent_dtype` (f32 by default) so rounding does not
    compound through the hidden-state recurrence.  fc2 weight/bias are
    zero-padded to a 128-lane-aligned output width for an unmasked q store.
    """
    H = tp["gru_w_hh"].shape[1]
    A = tp["fc2_w"].shape[0]
    A_pad = ((A + 127) // 128) * 128

    b_ih, b_hh = tp["gru_b_ih"], tp["gru_b_hh"]
    # r/z biases can be merged; b_in stays, b_hn must remain separate.
    b_i = jnp.concatenate(
        [b_ih[:H] + b_hh[:H], b_ih[H:2 * H] + b_hh[H:2 * H], b_ih[2 * H:]])

    w2_pad = jnp.zeros((H, A_pad), jnp.float32).at[:, :A].set(tp["fc2_w"].T)
    b2_pad = jnp.zeros((A_pad,), jnp.float32).at[:A].set(tp["fc2_b"])

    return {
        "w1": tp["fc1_w"].T.astype(matmul_dtype),            # (Din, H)
        "b1": tp["fc1_b"][None, :].astype(jnp.float32),      # (1, H)
        "w_ih": tp["gru_w_ih"].T.astype(matmul_dtype),       # (H, 3H)
        "b_i": b_i[None, :].astype(jnp.float32),             # (1, 3H)
        "w_hh": tp["gru_w_hh"].T.astype(recurrent_dtype),    # (H, 3H)
        "b_hn": b_hh[2 * H:][None, :].astype(jnp.float32),   # (1, H)
        "w2": w2_pad.astype(matmul_dtype),                    # (H, A_pad)
        "b2": b2_pad[None, :].astype(jnp.float32),            # (1, A_pad)
        "n_actions": A,
    }


# ---------------------------------------------------------------------------
# Pure-JAX references (exact PyTorch DRQNAgent.forward semantics).
# ---------------------------------------------------------------------------
def drqn_reference(obs, prev_action, hidden, tp):
    x = jnp.concatenate([obs, prev_action], axis=-1)
    h1 = jnp.maximum(x @ tp["fc1_w"].T + tp["fc1_b"], 0.0)
    H = hidden.shape[1]
    gi = h1 @ tp["gru_w_ih"].T + tp["gru_b_ih"]
    gh = hidden @ tp["gru_w_hh"].T + tp["gru_b_hh"]
    r = jax.nn.sigmoid(gi[:, :H] + gh[:, :H])
    z = jax.nn.sigmoid(gi[:, H:2 * H] + gh[:, H:2 * H])
    n = jnp.tanh(gi[:, 2 * H:] + r * gh[:, 2 * H:])
    h_new = (1.0 - z) * n + z * hidden
    q = h_new @ tp["fc2_w"].T + tp["fc2_b"]
    return q, h_new


def drqn_rollout_reference(obs_seq, act_seq, h0, tp):
    h = h0
    qs = []
    for t in range(obs_seq.shape[0]):
        q, h = drqn_reference(obs_seq[t], act_seq[t], h, tp)
        qs.append(q)
    return jnp.stack(qs), h


if __name__ == "__main__":
    obs_dim, action_dim, hidden_dim, batch, T = 24, 8, 32, 8, 8

    key = jax.random.PRNGKey(0)
    k_obs, k_act, k_par, k_oseq, k_aseq = jax.random.split(key, 5)

    obs = jax.random.normal(k_obs, (batch, obs_dim), jnp.float32)
    prev_action = jax.nn.one_hot(
        jax.random.randint(k_act, (batch,), 0, action_dim), action_dim,
        dtype=jnp.float32)
    hidden = jnp.zeros((batch, hidden_dim), jnp.float32)  # init_hidden(batch)

    tp = init_torch_params(k_par, obs_dim, action_dim, hidden_dim)

    # --- single-step, all-f32 weights: exact-semantics check ---------------
    kp_f32 = pack_params(tp, jnp.float32, jnp.float32)
    q32, h32 = drqn_forward(obs, prev_action, hidden, kp_f32)
    jax.block_until_ready((q32, h32))
    q_ref, h_ref = drqn_reference(obs, prev_action, hidden, tp)
    assert q32.shape == (batch, action_dim) and h32.shape == (batch, hidden_dim)
    assert jnp.allclose(q32, q_ref, atol=1e-5, rtol=1e-5)
    assert jnp.allclose(h32, h_ref, atol=1e-5, rtol=1e-5)

    # --- single-step, bf16 feed-forward / f32 recurrent weights ------------
    kp_bf16 = pack_params(tp, jnp.bfloat16, jnp.float32)
    q16, h16 = drqn_forward(obs, prev_action, hidden, kp_bf16)
    jax.block_until_ready((q16, h16))
    assert jnp.allclose(q16, q_ref, atol=5e-2, rtol=5e-2)
    assert jnp.allclose(h16, h_ref, atol=5e-2, rtol=5e-2)

    # --- rollout: T recurrent steps inside one pallas_call ------------------
    obs_seq = jax.random.normal(k_oseq, (T, batch, obs_dim), jnp.float32)
    act_seq = jax.nn.one_hot(
        jax.random.randint(k_aseq, (T, batch), 0, action_dim), action_dim,
        dtype=jnp.float32)
    qseq_ref, hT_ref = drqn_rollout_reference(obs_seq, act_seq, hidden, tp)

    qseq32, hT32 = drqn_rollout(obs_seq, act_seq, hidden, kp_f32)
    jax.block_until_ready((qseq32, hT32))
    assert qseq32.shape == (T, batch, action_dim)
    assert jnp.allclose(qseq32, qseq_ref, atol=1e-4, rtol=1e-4)
    assert jnp.allclose(hT32, hT_ref, atol=1e-4, rtol=1e-4)

    qseq16, hT16 = drqn_rollout(obs_seq, act_seq, hidden, kp_bf16)
    jax.block_until_ready((qseq16, hT16))
    assert jnp.allclose(qseq16, qseq_ref, atol=1e-1)
    assert jnp.allclose(hT16, hT_ref, atol=1e-1)

    print("KERNEL_OK")
</pallas_src>

<mosaic_0001>
module attributes {stable_mosaic.version = 11 : i64} {
  func.func @drqn_step_kernel(%arg0: memref<8x32xf32, #tpu.memory_space<vmem>>, %arg1: memref<8x32xf32, #tpu.memory_space<vmem>>, %arg2: memref<32x32xf32, #tpu.memory_space<vmem>>, %arg3: memref<1x32xf32, #tpu.memory_space<vmem>>, %arg4: memref<32x96xf32, #tpu.memory_space<vmem>>, %arg5: memref<1x96xf32, #tpu.memory_space<vmem>>, %arg6: memref<32x96xf32, #tpu.memory_space<vmem>>, %arg7: memref<1x32xf32, #tpu.memory_space<vmem>>, %arg8: memref<32x128xf32, #tpu.memory_space<vmem>>, %arg9: memref<1x128xf32, #tpu.memory_space<vmem>>, %arg10: memref<8x128xf32, #tpu.memory_space<vmem>>, %arg11: memref<8x32xf32, #tpu.memory_space<vmem>>) attributes {dimension_semantics = [], scalar_prefetch = 0 : i64, scratch_operands = 0 : i64, tpu.core_type = #tpu.core_type<tc>} {
    %c0 = arith.constant 0 : index
    %c0_0 = arith.constant 0 : index
    %0 = vector.load %arg0[%c0, %c0_0] : memref<8x32xf32, #tpu.memory_space<vmem>>, vector<8x32xf32>
    %c0_1 = arith.constant 0 : index
    %c0_2 = arith.constant 0 : index
    %1 = vector.load %arg1[%c0_1, %c0_2] : memref<8x32xf32, #tpu.memory_space<vmem>>, vector<8x32xf32>
    %c0_3 = arith.constant 0 : index
    %c0_4 = arith.constant 0 : index
    %2 = vector.load %arg2[%c0_3, %c0_4] : memref<32x32xf32, #tpu.memory_space<vmem>>, vector<32x32xf32>
    %c0_5 = arith.constant 0 : index
    %c0_6 = arith.constant 0 : index
    %3 = vector.load %arg3[%c0_5, %c0_6] : memref<1x32xf32, #tpu.memory_space<vmem>>, vector<1x32xf32>
    %c0_7 = arith.constant 0 : index
    %c0_8 = arith.constant 0 : index
    %4 = vector.load %arg4[%c0_7, %c0_8] : memref<32x96xf32, #tpu.memory_space<vmem>>, vector<32x96xf32>
    %c0_9 = arith.constant 0 : index
    %c0_10 = arith.constant 0 : index
    %5 = vector.load %arg5[%c0_9, %c0_10] : memref<1x96xf32, #tpu.memory_space<vmem>>, vector<1x96xf32>
    %c0_11 = arith.constant 0 : index
    %c0_12 = arith.constant 0 : index
    %6 = vector.load %arg6[%c0_11, %c0_12] : memref<32x96xf32, #tpu.memory_space<vmem>>, vector<32x96xf32>
    %c0_13 = arith.constant 0 : index
    %c0_14 = arith.constant 0 : index
    %7 = vector.load %arg7[%c0_13, %c0_14] : memref<1x32xf32, #tpu.memory_space<vmem>>, vector<1x32xf32>
    %cst = arith.constant dense<0.000000e+00> : vector<8x32xf32>
    %8 = tpu.matmul %0, %2, %cst {dimension_numbers = #tpu.dot_dimension_numbers<[1], [0], [0], [1], [0, 0, 1, 1], [], []>} : vector<8x32xf32>, vector<32x32xf32>, vector<8x32xf32> -> vector<8x32xf32>
    %9 = vector.broadcast %3 : vector<1x32xf32> to vector<8x32xf32>
    %10 = arith.addf %8, %9 : vector<8x32xf32>
    %cst_15 = arith.constant 0.000000e+00 : f32
    %11 = vector.broadcast %cst_15 : f32 to vector<8x32xf32>
    %12 = arith.maximumf %10, %11 : vector<8x32xf32>
    %cst_16 = arith.constant dense<0.000000e+00> : vector<8x96xf32>
    %13 = tpu.matmul %12, %4, %cst_16 {dimension_numbers = #tpu.dot_dimension_numbers<[1], [0], [0], [1], [0, 0, 1, 1], [], []>} : vector<8x32xf32>, vector<32x96xf32>, vector<8x96xf32> -> vector<8x96xf32>
    %14 = vector.broadcast %5 : vector<1x96xf32> to vector<8x96xf32>
    %15 = arith.addf %13, %14 : vector<8x96xf32>
    %cst_17 = arith.constant dense<0.000000e+00> : vector<8x96xf32>
    %16 = tpu.matmul %1, %6, %cst_17 {dimension_numbers = #tpu.dot_dimension_numbers<[1], [0], [0], [1], [0, 0, 1, 1], [], []>} : vector<8x32xf32>, vector<32x96xf32>, vector<8x96xf32> -> vector<8x96xf32>
    %17 = vector.extract_strided_slice %15 {offsets = [0, 0], sizes = [8, 32], strides = [1, 1]} : vector<8x96xf32> to vector<8x32xf32>
    %18 = vector.extract_strided_slice %16 {offsets = [0, 0], sizes = [8, 32], strides = [1, 1]} : vector<8x96xf32> to vector<8x32xf32>
    %19 = arith.addf %17, %18 : vector<8x32xf32>
    %20 = arith.negf %19 : vector<8x32xf32>
    %21 = math.exp %20 : vector<8x32xf32>
    %cst_18 = arith.constant 1.000000e+00 : f32
    %22 = vector.broadcast %cst_18 : f32 to vector<8x32xf32>
    %23 = arith.addf %22, %21 : vector<8x32xf32>
    %24 = arith.divf %22, %23 : vector<8x32xf32>
    %25 = vector.extract_strided_slice %15 {offsets = [0, 32], sizes = [8, 32], strides = [1, 1]} : vector<8x96xf32> to vector<8x32xf32>
    %26 = vector.extract_strided_slice %16 {offsets = [0, 32], sizes = [8, 32], strides = [1, 1]} : vector<8x96xf32> to vector<8x32xf32>
    %27 = arith.addf %25, %26 : vector<8x32xf32>
    %28 = arith.negf %27 : vector<8x32xf32>
    %29 = math.exp %28 : vector<8x32xf32>
    %cst_19 = arith.constant 1.000000e+00 : f32
    %30 = vector.broadcast %cst_19 : f32 to vector<8x32xf32>
    %31 = arith.addf %30, %29 : vector<8x32xf32>
    %32 = arith.divf %30, %31 : vector<8x32xf32>
    %33 = vector.extract_strided_slice %15 {offsets = [0, 64], sizes = [8, 32], strides = [1, 1]} : vector<8x96xf32> to vector<8x32xf32>
    %34 = vector.extract_strided_slice %16 {offsets = [0, 64], sizes = [8, 32], strides = [1, 1]} : vector<8x96xf32> to vector<8x32xf32>
    %35 = vector.broadcast %7 : vector<1x32xf32> to vector<8x32xf32>
    %36 = arith.addf %34, %35 : vector<8x32xf32>
    %37 = arith.mulf %24, %36 : vector<8x32xf32>
    %38 = arith.addf %33, %37 : vector<8x32xf32>
    %39 = math.tanh %38 : vector<8x32xf32>
    %cst_20 = arith.constant 1.000000e+00 : f32
    %40 = vector.broadcast %cst_20 : f32 to vector<8x32xf32>
    %41 = arith.subf %40, %32 : vector<8x32xf32>
    %42 = arith.mulf %41, %39 : vector<8x32xf32>
    %43 = arith.mulf %32, %1 : vector<8x32xf32>
    %44 = arith.addf %42, %43 : vector<8x32xf32>
    %c0_21 = arith.constant 0 : index
    %c0_22 = arith.constant 0 : index
    %45 = vector.load %arg8[%c0_21, %c0_22] : memref<32x128xf32, #tpu.memory_space<vmem>>, vector<32x128xf32>
    %cst_23 = arith.constant dense<0.000000e+00> : vector<8x128xf32>
    %46 = tpu.matmul %44, %45, %cst_23 {dimension_numbers = #tpu.dot_dimension_numbers<[1], [0], [0], [1], [0, 0, 1, 1], [], []>} : vector<8x32xf32>, vector<32x128xf32>, vector<8x128xf32> -> vector<8x128xf32>
    %c0_24 = arith.constant 0 : index
    %c0_25 = arith.constant 0 : index
    %47 = vector.load %arg9[%c0_24, %c0_25] : memref<1x128xf32, #tpu.memory_space<vmem>>, vector<1x128xf32>
    %48 = vector.broadcast %47 : vector<1x128xf32> to vector<8x128xf32>
    %49 = arith.addf %46, %48 : vector<8x128xf32>
    %c0_26 = arith.constant 0 : index
    %c0_27 = arith.constant 0 : index
    %50 = vector.load %arg10[%c0_26, %c0_27] : memref<8x128xf32, #tpu.memory_space<vmem>>, vector<8x128xf32>
    tpu.vector_store %arg10[%c0_26, %c0_27], %49 {strides = array<i32>} : memref<8x128xf32, #tpu.memory_space<vmem>>, vector<8x128xf32>,
    %c0_28 = arith.constant 0 : index
    %c0_29 = arith.constant 0 : index
    %51 = vector.load %arg11[%c0_28, %c0_29] : memref<8x32xf32, #tpu.memory_space<vmem>>, vector<8x32xf32>
    tpu.vector_store %arg11[%c0_28, %c0_29], %44 {strides = array<i32>} : memref<8x32xf32, #tpu.memory_space<vmem>>, vector<8x32xf32>,
    return
  }
}

</mosaic_0001>

<llo_original>
// kernel: tpu_custom_call.1
$region0: #{tpu_custom_call.1}
  #allocation0 [shape = 'u32[]', space=smem, size = 0x4, offset = 0x4, fixed_abs, tag = 'smem constant byte address 0x4 - core index']
  #allocation1 [shape = 'u32[144,128]{1,0:T(1,128)}', space=vmem, size = 0x12000, scoped, tag = 'internal scratch']
  %s0 = inlined_call_operand.hbm [shape: f32[8,32], index: 0, kind: input, shape index: {}]
  %s1 = inlined_call_operand.hbm [shape: f32[8,32], index: 1, kind: input, shape index: {}]
  %s2 = inlined_call_operand.hbm [shape: f32[32,32], index: 2, kind: input, shape index: {}]
  %s3 = inlined_call_operand.vmem [shape: f32[1,32], index: 3, kind: input, shape index: {}]
  %s4 = inlined_call_operand.hbm [shape: f32[32,96], index: 4, kind: input, shape index: {}]
  %s5 = inlined_call_operand.vmem [shape: f32[1,96], index: 5, kind: input, shape index: {}]
  %s6 = inlined_call_operand.hbm [shape: f32[32,96], index: 6, kind: input, shape index: {}]
  %s7 = inlined_call_operand.vmem [shape: f32[1,32], index: 7, kind: input, shape index: {}]
  %s8 = inlined_call_operand.hbm [shape: f32[32,128], index: 8, kind: input, shape index: {}]
  %s9 = inlined_call_operand.vmem [shape: f32[1,128], index: 9, kind: input, shape index: {}]
  %s10 = inlined_call_operand.hbm [shape: f32[8,128], index: 10, kind: output, shape index: {0}]
  %s11 = inlined_call_operand.hbm [shape: f32[8,32], index: 11, kind: output, shape index: {1}]
  %12 = xla_tuple %s10, %s11
  %s13 = sld [smem:[#allocation0]]
  $region82: #{tpu_custom_call.1} parent=0
    _
  %s15 = ssub.s32 1, %s13
  %s16 = scalar_select 0, %s15, %s13
  $region1: #{tpu_custom_call.1} parent=0
    #allocation2 [shape = 'u8[4096]{0}', space=vmem, size = 0x1000, scoped, tag = 'input window, operand 0, single buffered']
    #allocation3 [shape = 's32[1]{0}', space=sflag, size = 0x4, scoped, tag = 'scoped memory for tpu_custom_call.1']
    #allocation4 [shape = 's32[1]{0}', space=sflag, size = 0x4, scoped, tag = 'scoped memory for tpu_custom_call.1']
    #allocation5 [shape = 'u8[4096]{0}', space=vmem, size = 0x1000, scoped, tag = 'input window, operand 1, single buffered']
    #allocation6 [shape = 's32[1]{0}', space=sflag, size = 0x4, scoped, tag = 'scoped memory for tpu_custom_call.1']
    #allocation7 [shape = 'u8[16384]{0}', space=vmem, size = 0x4000, scoped, tag = 'input window, operand 2, single buffered']
    #allocation8 [shape = 'u8[16384]{0}', space=vmem, size = 0x4000, scoped, tag = 'input window, operand 4, single buffered']
    #allocation9 [shape = 's32[1]{0}', space=sflag, size = 0x4, scoped, tag = 'scoped memory for tpu_custom_call.1']
    #allocation10 [shape = 'u8[16384]{0}', space=vmem, size = 0x4000, scoped, tag = 'input window, operand 6, single buffered']
    #allocation11 [shape = 'u8[16384]{0}', space=vmem, size = 0x4000, scoped, tag = 'input window, operand 8, single buffered']
    #allocation12 [shape = 's32[1]{0}', space=sflag, size = 0x4, scoped, tag = 'scoped memory for tpu_custom_call.1']
    #allocation13 [shape = 'u8[4096]{0}', space=vmem, size = 0x1000, scoped, tag = 'output window, operand 0, single buffered']
    #allocation14 [shape = 'u8[4096]{0}', space=vmem, size = 0x1000, scoped, tag = 'output window, operand 1, single buffered']
    #allocation15 [shape = 's32[1]{0}', space=sflag, size = 0x4, scoped, tag = 'scoped memory for tpu_custom_call.1']
    %17 = vsyncpa [#allocation3], 0
    %18 = vsyncpa [#allocation6], 0
    %19 = vsyncpa [#allocation9], 0
    %20 = vsyncpa [#allocation12], 0
    %21 = vsyncpa [#allocation4], 0
    %22 = vsyncpa [#allocation15], 0
    // Predicated region
    $region2: #{tpu_custom_call.1} parent=1 // pred_check
      _
    $region3: #{tpu_custom_call.1} parent=1 // pred_check_branch
      %24 = sbr.rel (0) target = $region5
    $region4: #{tpu_custom_call.1} parent=1 // pred_region
      %s26 = ssub.s32 128, 128
      %27 = vsyncadd [#allocation3], %s26
      %s29 = sshll.u32 [#allocation2], 4
      %s30 = int_to_ptr.vmem [resolvable:$true] %s29
      %32 = dma.hbm_to_vmem [thread:$0]  %s0, 128, %s30, [#allocation3]
    $region5: #{tpu_custom_call.1} parent=1 // pred_fallthru
      _
    // Predicated region
    $region6: #{tpu_custom_call.1} parent=1 // pred_check
      _
    $region7: #{tpu_custom_call.1} parent=1 // pred_check_branch
      %34 = sbr.rel (0) target = $region9
    $region8: #{tpu_custom_call.1} parent=1 // pred_region
      %s36 = ssub.s32 128, 128
      %37 = vsyncadd [#allocation6], %s36
      %s39 = sshll.u32 [#allocation5], 4
      %s40 = int_to_ptr.vmem [resolvable:$true] %s39
      %42 = dma.hbm_to_vmem [thread:$0]  %s1, 128, %s40, [#allocation6]
    $region9: #{tpu_custom_call.1} parent=1 // pred_fallthru
      _
    // Predicated region
    $region10: #{tpu_custom_call.1} parent=1 // pred_check
      _
    $region11: #{tpu_custom_call.1} parent=1 // pred_check_branch
      %44 = sbr.rel (0) target = $region13
    $region12: #{tpu_custom_call.1} parent=1 // pred_region
      %s46 = ssub.s32 512, 512
      %47 = vsyncadd [#allocation6], %s46
      %s48 = sshll.u32 [#allocation7], 4
      %s49 = int_to_ptr.vmem [resolvable:$true] %s48
      %54 = dma.hbm_to_vmem [thread:$0]  %s2, 512, %s49, [#allocation6], 128, 128, 8
    $region13: #{tpu_custom_call.1} parent=1 // pred_fallthru
      _
    // Predicated region
    $region14: #{tpu_custom_call.1} parent=1 // pred_check
      _
    $region15: #{tpu_custom_call.1} parent=1 // pred_check_branch
      %56 = sbr.rel (0) target = $region17
    $region16: #{tpu_custom_call.1} parent=1 // pred_region
      _
    $region17: #{tpu_custom_call.1} parent=1 // pred_fallthru
      _
    // Predicated region
    $region18: #{tpu_custom_call.1} parent=1 // pred_check
      _
    $region19: #{tpu_custom_call.1} parent=1 // pred_check_branch
      %58 = sbr.rel (0) target = $region21
    $region20: #{tpu_custom_call.1} parent=1 // pred_region
      %s60 = ssub.s32 512, 512
      %61 = vsyncadd [#allocation9], %s60
      %s62 = sshll.u32 [#allocation8], 4
      %s63 = int_to_ptr.vmem [resolvable:$true] %s62
      %68 = dma.hbm_to_vmem [thread:$0]  %s4, 512, %s63, [#allocation9], 128, 128, 8
    $region21: #{tpu_custom_call.1} parent=1 // pred_fallthru
      _
    // Predicated region
    $region22: #{tpu_custom_call.1} parent=1 // pred_check
      _
    $region23: #{tpu_custom_call.1} parent=1 // pred_check_branch
      %70 = sbr.rel (0) target = $region25
    $region24: #{tpu_custom_call.1} parent=1 // pred_region
      _
    $region25: #{tpu_custom_call.1} parent=1 // pred_fallthru
      _
    // Predicated region
    $region26: #{tpu_custom_call.1} parent=1 // pred_check
      _
    $region27: #{tpu_custom_call.1} parent=1 // pred_check_branch
      %72 = sbr.rel (0) target = $region29
    $region28: #{tpu_custom_call.1} parent=1 // pred_region
      %s74 = ssub.s32 512, 512
      %75 = vsyncadd [#allocation9], %s74
      %s76 = sshll.u32 [#allocation10], 4
      %s77 = int_to_ptr.vmem [resolvable:$true] %s76
      %82 = dma.hbm_to_vmem [thread:$0]  %s6, 512, %s77, [#allocation9], 128, 128, 8
    $region29: #{tpu_custom_call.1} parent=1 // pred_fallthru
      _
    // Predicated region
    $region30: #{tpu_custom_call.1} parent=1 // pred_check
      _
    $region31: #{tpu_custom_call.1} parent=1 // pred_check_branch
      %84 = sbr.rel (0) target = $region33
    $region32: #{tpu_custom_call.1} parent=1 // pred_region
      _
    $region33: #{tpu_custom_call.1} parent=1 // pred_fallthru
      _
    // Predicated region
    $region34: #{tpu_custom_call.1} parent=1 // pred_check
      _
    $region35: #{tpu_custom_call.1} parent=1 // pred_check_branch
      %86 = sbr.rel (0) target = $region37
    $region36: #{tpu_custom_call.1} parent=1 // pred_region
      %s88 = ssub.s32 512, 512
      %89 = vsyncadd [#allocation12], %s88
      %s90 = sshll.u32 [#allocation11], 4
      %s91 = int_to_ptr.vmem [resolvable:$true] %s90
      %96 = dma.hbm_to_vmem [thread:$0]  %s8, 512, %s91, [#allocation12], 128, 128, 8
    $region37: #{tpu_custom_call.1} parent=1 // pred_fallthru
      _
    // Predicated region
    $region38: #{tpu_custom_call.1} parent=1 // pred_check
      _
    $region39: #{tpu_custom_call.1} parent=1 // pred_check_branch
      %98 = sbr.rel (0) target = $region41
    $region40: #{tpu_custom_call.1} parent=1 // pred_region
      _
    $region41: #{tpu_custom_call.1} parent=1 // pred_fallthru
      _
    // Predicated region
    $region42: #{tpu_custom_call.1} parent=1 // pred_check
      _
    $region43: #{tpu_custom_call.1} parent=1 // pred_check_branch
      %100 = sbr.rel (0) target = $region45
    $region44: #{tpu_custom_call.1} parent=1 // pred_region
      %101 = dma.done [#allocation3], 128
    $region45: #{tpu_custom_call.1} parent=1 // pred_fallthru
      _
    // Predicated region
    $region46: #{tpu_custom_call.1} parent=1 // pred_check
      _
    $region47: #{tpu_custom_call.1} parent=1 // pred_check_branch
      %103 = sbr.rel (0) target = $region49
    $region48: #{tpu_custom_call.1} parent=1 // pred_region
      %104 = dma.done [#allocation6], 128
    $region49: #{tpu_custom_call.1} parent=1 // pred_fallthru
      _
    // Predicated region
    $region50: #{tpu_custom_call.1} parent=1 // pred_check
      _
    $region51: #{tpu_custom_call.1} parent=1 // pred_check_branch
      %106 = sbr.rel (0) target = $region53
    $region52: #{tpu_custom_call.1} parent=1 // pred_region
      %107 = dma.done [#allocation6], 512
    $region53: #{tpu_custom_call.1} parent=1 // pred_fallthru
      _
    // Predicated region
    $region54: #{tpu_custom_call.1} parent=1 // pred_check
      _
    $region55: #{tpu_custom_call.1} parent=1 // pred_check_branch
      %109 = sbr.rel (0) target = $region57
    $region56: #{tpu_custom_call.1} parent=1 // pred_region
      %110 = dma.done [#allocation9], 512
    $region57: #{tpu_custom_call.1} parent=1 // pred_fallthru
      _
    // Predicated region
    $region58: #{tpu_custom_call.1} parent=1 // pred_check
      _
    $region59: #{tpu_custom_call.1} parent=1 // pred_check_branch
      %112 = sbr.rel (0) target = $region61
    $region60: #{tpu_custom_call.1} parent=1 // pred_region
      %113 = dma.done [#allocation9], 512
    $region61: #{tpu_custom_call.1} parent=1 // pred_fallthru
      _
    // Predicated region
    $region62: #{tpu_custom_call.1} parent=1 // pred_check
      _
    $region63: #{tpu_custom_call.1} parent=1 // pred_check_branch
      %115 = sbr.rel (0) target = $region65
    $region64: #{tpu_custom_call.1} parent=1 // pred_region
      %116 = dma.done [#allocation12], 512
    $region65: #{tpu_custom_call.1} parent=1 // pred_fallthru
      _
    %v117 = vld [vmem:[#allocation2] sm:$0xff]
    %v118 = vld [vmem:[#allocation5] sm:$0xff]
    %v119 = vld [vmem:[#allocation7] sm:$0xff]
    %v120 = vld [vmem:[#allocation7 + $0x8] sm:$0xff]
    %v121 = vld [vmem:[#allocation7 + $0x10] sm:$0xff]
    %v122 = vld [vmem:[#allocation7 + $0x18] sm:$0xff]
    %v123 = vld [vmem:[%s3] sm:$0x1]
    %v124 = vld [vmem:[#allocation8] sm:$0xff]
    %v125 = vld [vmem:[#allocation8 + $0x8] sm:$0xff]
    %v126 = vld [vmem:[#allocation8 + $0x10] sm:$0xff]
    %v127 = vld [vmem:[#allocation8 + $0x18] sm:$0xff]
    %v128 = vld [vmem:[%s5] sm:$0x1]
    %v129 = vld [vmem:[#allocation10] sm:$0xff]
    %v130 = vld [vmem:[#allocation10 + $0x8] sm:$0xff]
    %v131 = vld [vmem:[#allocation10 + $0x10] sm:$0xff]
    %v132 = vld [vmem:[#allocation10 + $0x18] sm:$0xff]
    %v133 = vld [vmem:[%s7] sm:$0x1]
    %v135 = vlaneseq
    %v136 = vshrl.u32 %v135, 7
    %v137 = vsub.s32 0, %v136
    %v138 = vrot.slane %v123, %v137
    %vm140 = vcmask 261120
    %v142 = vsel %vm140, %v117, 0
    %144 = vmatprep.subr.mxu0 0.0
    %145 = vmatpush1.msra.mxu0 %v119
    %146 = vmatprep.subr.mxu0 0.0
    %147 = vmatpush1.msra.mxu0 %v120
    %148 = vmatprep.subr.mxu0 0.0
    %149 = vmatpush1.msra.mxu0 %v121
    %150 = vmatprep.subr.mxu0 0.0
    %151 = vmatpush1.msra.mxu0 %v122
    %152 = vmatprep.subr.mxu0 0.0
    %153 = vmatpush1.msra.mxu0 0.0
    %154 = vmatprep.subr.mxu0 0.0
    %155 = vmatpush1.msra.mxu0 0.0
    %156 = vmatprep.subr.mxu0 0.0
    %157 = vmatpush1.msra.mxu0 0.0
    %158 = vmatprep.subr.mxu0 0.0
    %159 = vmatpush1.msra.mxu0 0.0
    %160 = vmatprep.subr.mxu0 0.0
    %161 = vmatpush1.msra.mxu0 0.0
    %162 = vmatprep.subr.mxu0 0.0
    %163 = vmatpush1.msra.mxu0 0.0
    %164 = vmatprep.subr.mxu0 0.0
    %165 = vmatpush1.msra.mxu0 0.0
    %166 = vmatprep.subr.mxu0 0.0
    %167 = vmatpush1.msra.mxu0 0.0
    %168 = vmatprep.subr.mxu0 0.0
    %169 = vmatpush1.msra.mxu0 0.0
    %170 = vmatprep.subr.mxu0 0.0
    %171 = vmatpush1.msra.mxu0 0.0
    %172 = vmatprep.subr.mxu0 0.0
    %173 = vmatpush1.msra.mxu0 0.0
    %174 = vmatprep.subr.mxu0 0.0
    %175 = vmatpush1.msra.mxu0 0.0
    %176 = vmatprep.subr.mxu0 0.0
    %177 = vmatpush1.msra.mxu0 0.0
    %178 = vmatprep.subr.mxu0 0.0
    %179 = vmatpush1.msra.mxu0 0.0
    %180 = vmatprep.subr.mxu0 0.0
    %181 = vmatpush1.msra.mxu0 0.0
    %182 = vmatprep.subr.mxu0 0.0
    %183 = vmatpush1.msra.mxu0 0.0
    %184 = vmatprep.subr.mxu0 0.0
    %185 = vmatpush1.msra.mxu0 0.0
    %186 = vmatprep.subr.mxu0 0.0
    %187 = vmatpush1.msra.mxu0 0.0
    %188 = vmatprep.subr.mxu0 0.0
    %189 = vmatpush1.msra.mxu0 0.0
    %190 = vmatprep.subr.mxu0 0.0
    %191 = vmatpush1.msra.mxu0 0.0
    %192 = vmatprep.subr.mxu0 0.0
    %193 = vmatpush1.msra.mxu0 0.0
    %194 = vmatprep.subr.mxu0 0.0
    %195 = vmatpush1.msra.mxu0 0.0
    %196 = vmatprep.subr.mxu0 0.0
    %197 = vmatpush1.msra.mxu0 0.0
    %198 = vmatprep.subr.mxu0 0.0
    %199 = vmatpush1.msra.mxu0 0.0
    %200 = vmatprep.subr.mxu0 0.0
    %201 = vmatpush1.msra.mxu0 0.0
    %202 = vmatprep.subr.mxu0 0.0
    %203 = vmatpush1.msra.mxu0 0.0
    %204 = vmatprep.subr.mxu0 0.0
    %205 = vmatpush1.msra.mxu0 0.0
    %206 = vmatprep.subr.mxu0 0.0
    %207 = vmatpush1.msra.mxu0 0.0
    %208 = vmatprep.mubr.f32.mxu0 0.0
    %209 = vmatmul.mubr.f32.gmra.mrb[0].mxu0 %v142
    %v210 = vpop.f32.mrb[0].mxu0
    %v211 = vadd.f32 %v138, %v210
    %v212 = vpop.f32.mrb[0].mxu0
    %213 = vdwg.mxu0
    %v214 = vmax.f32 %v211, 0.0
    %v216 = vlaneseq
    %v217 = vshrl.u32 %v216, 7
    %v218 = vsub.s32 0, %v217
    %v219 = vrot.slane %v128, %v218
    %v222 = vsel %vm140, %v214, 0
    %224 = vmatprep.subr.mxu0 0.0
    %225 = vmatpush1.msra.mxu0 %v124
    %226 = vmatprep.subr.mxu0 0.0
    %227 = vmatpush1.msra.mxu0 %v125
    %228 = vmatprep.subr.mxu0 0.0
    %229 = vmatpush1.msra.mxu0 %v126
    %230 = vmatprep.subr.mxu0 0.0
    %231 = vmatpush1.msra.mxu0 %v127
    %232 = vmatprep.subr.mxu0 0.0
    %233 = vmatpush1.msra.mxu0 0.0
    %234 = vmatprep.subr.mxu0 0.0
    %235 = vmatpush1.msra.mxu0 0.0
    %236 = vmatprep.subr.mxu0 0.0
    %237 = vmatpush1.msra.mxu0 0.0
    %238 = vmatprep.subr.mxu0 0.0
    %239 = vmatpush1.msra.mxu0 0.0
    %240 = vmatprep.subr.mxu0 0.0
    %241 = vmatpush1.msra.mxu0 0.0
    %242 = vmatprep.subr.mxu0 0.0
    %243 = vmatpush1.msra.mxu0 0.0
    %244 = vmatprep.subr.mxu0 0.0
    %245 = vmatpush1.msra.mxu0 0.0
    %246 = vmatprep.subr.mxu0 0.0
    %247 = vmatpush1.msra.mxu0 0.0
    %248 = vmatprep.subr.mxu0 0.0
    %249 = vmatpush1.msra.mxu0 0.0
    %250 = vmatprep.subr.mxu0 0.0
    %251 = vmatpush1.msra.mxu0 0.0
    %252 = vmatprep.subr.mxu0 0.0
    %253 = vmatpush1.msra.mxu0 0.0
    %254 = vmatprep.subr.mxu0 0.0
    %255 = vmatpush1.msra.mxu0 0.0
    %256 = vmatprep.subr.mxu0 0.0
    %257 = vmatpush1.msra.mxu0 0.0
    %258 = vmatprep.subr.mxu0 0.0
    %259 = vmatpush1.msra.mxu0 0.0
    %260 = vmatprep.subr.mxu0 0.0
    %261 = vmatpush1.msra.mxu0 0.0
    %262 = vmatprep.subr.mxu0 0.0
    %263 = vmatpush1.msra.mxu0 0.0
    %264 = vmatprep.subr.mxu0 0.0
    %265 = vmatpush1.msra.mxu0 0.0
    %266 = vmatprep.subr.mxu0 0.0
    %267 = vmatpush1.msra.mxu0 0.0
    %268 = vmatprep.subr.mxu0 0.0
    %269 = vmatpush1.msra.mxu0 0.0
    %270 = vmatprep.subr.mxu0 0.0
    %271 = vmatpush1.msra.mxu0 0.0
    %272 = vmatprep.subr.mxu0 0.0
    %273 = vmatpush1.msra.mxu0 0.0
    %274 = vmatprep.subr.mxu0 0.0
    %275 = vmatpush1.msra.mxu0 0.0
    %276 = vmatprep.subr.mxu0 0.0
    %277 = vmatpush1.msra.mxu0 0.0
    %278 = vmatprep.subr.mxu0 0.0
    %279 = vmatpush1.msra.mxu0 0.0
    %280 = vmatprep.subr.mxu0 0.0
    %281 = vmatpush1.msra.mxu0 0.0
    %282 = vmatprep.subr.mxu0 0.0
    %283 = vmatpush1.msra.mxu0 0.0
    %284 = vmatprep.subr.mxu0 0.0
    %285 = vmatpush1.msra.mxu0 0.0
    %286 = vmatprep.subr.mxu0 0.0
    %287 = vmatpush1.msra.mxu0 0.0
    %288 = vmatprep.mubr.f32.mxu0 0.0
    %289 = vmatmul.mubr.f32.gmra.mrb[0].mxu0 %v222
    %v290 = vpop.f32.mrb[0].mxu0
    %v291 = vadd.f32 %v219, %v290
    %v292 = vpop.f32.mrb[0].mxu0
    %293 = vdwg.mxu0
    %v295 = vsel %vm140, %v118, 0
    %297 = vmatprep.subr.mxu0 0.0
    %298 = vmatpush1.msra.mxu0 %v129
    %299 = vmatprep.subr.mxu0 0.0
    %300 = vmatpush1.msra.mxu0 %v130
    %301 = vmatprep.subr.mxu0 0.0
    %302 = vmatpush1.msra.mxu0 %v131
    %303 = vmatprep.subr.mxu0 0.0
    %304 = vmatpush1.msra.mxu0 %v132
    %305 = vmatprep.subr.mxu0 0.0
    %306 = vmatpush1.msra.mxu0 0.0
    %307 = vmatprep.subr.mxu0 0.0
    %308 = vmatpush1.msra.mxu0 0.0
    %309 = vmatprep.subr.mxu0 0.0
    %310 = vmatpush1.msra.mxu0 0.0
    %311 = vmatprep.subr.mxu0 0.0
    %312 = vmatpush1.msra.mxu0 0.0
    %313 = vmatprep.subr.mxu0 0.0
    %314 = vmatpush1.msra.mxu0 0.0
    %315 = vmatprep.subr.mxu0 0.0
    %316 = vmatpush1.msra.mxu0 0.0
    %317 = vmatprep.subr.mxu0 0.0
    %318 = vmatpush1.msra.mxu0 0.0
    %319 = vmatprep.subr.mxu0 0.0
    %320 = vmatpush1.msra.mxu0 0.0
    %321 = vmatprep.subr.mxu0 0.0
    %322 = vmatpush1.msra.mxu0 0.0
    %323 = vmatprep.subr.mxu0 0.0
    %324 = vmatpush1.msra.mxu0 0.0
    %325 = vmatprep.subr.mxu0 0.0
    %326 = vmatpush1.msra.mxu0 0.0
    %327 = vmatprep.subr.mxu0 0.0
    %328 = vmatpush1.msra.mxu0 0.0
    %329 = vmatprep.subr.mxu0 0.0
    %330 = vmatpush1.msra.mxu0 0.0
    %331 = vmatprep.subr.mxu0 0.0
    %332 = vmatpush1.msra.mxu0 0.0
    %333 = vmatprep.subr.mxu0 0.0
    %334 = vmatpush1.msra.mxu0 0.0
    %335 = vmatprep.subr.mxu0 0.0
    %336 = vmatpush1.msra.mxu0 0.0
    %337 = vmatprep.subr.mxu0 0.0
    %338 = vmatpush1.msra.mxu0 0.0
    %339 = vmatprep.subr.mxu0 0.0
    %340 = vmatpush1.msra.mxu0 0.0
    %341 = vmatprep.subr.mxu0 0.0
    %342 = vmatpush1.msra.mxu0 0.0
    %343 = vmatprep.subr.mxu0 0.0
    %344 = vmatpush1.msra.mxu0 0.0
    %345 = vmatprep.subr.mxu0 0.0
    %346 = vmatpush1.msra.mxu0 0.0
    %347 = vmatprep.subr.mxu0 0.0
    %348 = vmatpush1.msra.mxu0 0.0
    %349 = vmatprep.subr.mxu0 0.0
    %350 = vmatpush1.msra.mxu0 0.0
    %351 = vmatprep.subr.mxu0 0.0
    %352 = vmatpush1.msra.mxu0 0.0
    %353 = vmatprep.subr.mxu0 0.0
    %354 = vmatpush1.msra.mxu0 0.0
    %355 = vmatprep.subr.mxu0 0.0
    %356 = vmatpush1.msra.mxu0 0.0
    %357 = vmatprep.subr.mxu0 0.0
    %358 = vmatpush1.msra.mxu0 0.0
    %359 = vmatprep.subr.mxu0 0.0
    %360 = vmatpush1.msra.mxu0 0.0
    %361 = vmatprep.mubr.f32.mxu0 0.0
    %362 = vmatmul.mubr.f32.gmra.mrb[0].mxu0 %v295
    %v363 = vpop.f32.mrb[0].mxu0
    %v364 = vadd.f32 0.0, %v363
    %v365 = vpop.f32.mrb[0].mxu0
    %366 = vdwg.mxu0
    %v367 = vadd.f32 %v291, %v364
    %v368 = vxor.u32 %v367, 2147483648
    %v369 = vmul.f32 %v368, 1.442695
    %v370 = vpow.pop %v369
    %v371 = vadd.f32 %v370, 1.0
    %v372 = vrcp.pop %v371
    %v373 = vmul.f32 1.0, %v372
    %v375 = vlaneseq
    %v376 = vshrl.u32 %v375, 7
    %v377 = vsub.s32 0, %v376
    %v378 = vrot.slane %v133, %v377
    %379 = vrot.lane.b32.xlu0 %v378, 64
    %v380 = vpop.permute.xlu0 %379
    %v382 = vadd.f32 %v364, %v380
    %384 = vrot.lane.b32.xlu0 %v382, 64
    %v385 = vpop.permute.xlu0 %384
    %v387 = vmul.f32 %v373, %v385
    %389 = vrot.lane.b32.xlu0 %v387, 64
    %v390 = vpop.permute.xlu0 %389
    %v392 = vadd.f32 %v291, %v390
    %v393 = vtanh.pop %v392
    %v394 = vsub.f32 1.0, %v373
    %396 = vrot.lane.b32.xlu0 %v393, 96
    %v397 = vpop.permute.xlu0 %396
    %v399 = vmul.f32 %v394, %v397
    %400 = vrot.lane.b32.xlu0 %v118, 32
    %v401 = vpop.permute.xlu0 %400
    %v403 = vmul.f32 %v373, %v401
    %v404 = vadd.f32 %v399, %v403
    %v405 = vld [vmem:[#allocation11] sm:$0xff]
    %v406 = vld [vmem:[#allocation11 + $0x8] sm:$0xff]
    %v407 = vld [vmem:[#allocation11 + $0x10] sm:$0xff]
    %v408 = vld [vmem:[#allocation11 + $0x18] sm:$0xff]
    %v409 = vld [vmem:[%s9] sm:$0x1]
    %v411 = vlaneseq
    %v412 = vshrl.u32 %v411, 7
    %v413 = vsub.s32 0, %v412
    %v414 = vrot.slane %v409, %v413
    %417 = vrot.lane.b32.xlu0 %v404, 96
    %v418 = vpop.permute.xlu0 %417
    %v419 = vsel %vm140, %v418, 0
    %421 = vmatprep.subr.mxu0 0.0
    %422 = vmatpush1.msra.mxu0 %v405
    %423 = vmatprep.subr.mxu0 0.0
    %424 = vmatpush1.msra.mxu0 %v406
    %425 = vmatprep.subr.mxu0 0.0
    %426 = vmatpush1.msra.mxu0 %v407
    %427 = vmatprep.subr.mxu0 0.0
    %428 = vmatpush1.msra.mxu0 %v408
    %429 = vmatprep.subr.mxu0 0.0
    %430 = vmatpush1.msra.mxu0 0.0
    %431 = vmatprep.subr.mxu0 0.0
    %432 = vmatpush1.msra.mxu0 0.0
    %433 = vmatprep.subr.mxu0 0.0
    %434 = vmatpush1.msra.mxu0 0.0
    %435 = vmatprep.subr.mxu0 0.0
    %436 = vmatpush1.msra.mxu0 0.0
    %437 = vmatprep.subr.mxu0 0.0
    %438 = vmatpush1.msra.mxu0 0.0
    %439 = vmatprep.subr.mxu0 0.0
    %440 = vmatpush1.msra.mxu0 0.0
    %441 = vmatprep.subr.mxu0 0.0
    %442 = vmatpush1.msra.mxu0 0.0
    %443 = vmatprep.subr.mxu0 0.0
    %444 = vmatpush1.msra.mxu0 0.0
    %445 = vmatprep.subr.mxu0 0.0
    %446 = vmatpush1.msra.mxu0 0.0
    %447 = vmatprep.subr.mxu0 0.0
    %448 = vmatpush1.msra.mxu0 0.0
    %449 = vmatprep.subr.mxu0 0.0
    %450 = vmatpush1.msra.mxu0 0.0
    %451 = vmatprep.subr.mxu0 0.0
    %452 = vmatpush1.msra.mxu0 0.0
    %453 = vmatprep.subr.mxu0 0.0
    %454 = vmatpush1.msra.mxu0 0.0
    %455 = vmatprep.subr.mxu0 0.0
    %456 = vmatpush1.msra.mxu0 0.0
    %457 = vmatprep.subr.mxu0 0.0
    %458 = vmatpush1.msra.mxu0 0.0
    %459 = vmatprep.subr.mxu0 0.0
    %460 = vmatpush1.msra.mxu0 0.0
    %461 = vmatprep.subr.mxu0 0.0
    %462 = vmatpush1.msra.mxu0 0.0
    %463 = vmatprep.subr.mxu0 0.0
    %464 = vmatpush1.msra.mxu0 0.0
    %465 = vmatprep.subr.mxu0 0.0
    %466 = vmatpush1.msra.mxu0 0.0
    %467 = vmatprep.subr.mxu0 0.0
    %468 = vmatpush1.msra.mxu0 0.0
    %469 = vmatprep.subr.mxu0 0.0
    %470 = vmatpush1.msra.mxu0 0.0
    %471 = vmatprep.subr.mxu0 0.0
    %472 = vmatpush1.msra.mxu0 0.0
    %473 = vmatprep.subr.mxu0 0.0
    %474 = vmatpush1.msra.mxu0 0.0
    %475 = vmatprep.subr.mxu0 0.0
    %476 = vmatpush1.msra.mxu0 0.0
    %477 = vmatprep.subr.mxu0 0.0
    %478 = vmatpush1.msra.mxu0 0.0
    %479 = vmatprep.subr.mxu0 0.0
    %480 = vmatpush1.msra.mxu0 0.0
    %481 = vmatprep.subr.mxu0 0.0
    %482 = vmatpush1.msra.mxu0 0.0
    %483 = vmatprep.subr.mxu0 0.0
    %484 = vmatpush1.msra.mxu0 0.0
    %485 = vmatprep.mubr.f32.mxu0 0.0
    %486 = vmatmul.mubr.f32.gmra.mrb[0].mxu0 %v419
    %v487 = vpop.f32.mrb[0].mxu0
    %v488 = vadd.f32 %v414, %v487
    %v489 = vpop.f32.mrb[0].mxu0
    %490 = vdwg.mxu0
    %491 = vst [vmem:[#allocation13] sm:$0xff] %v488
    %493 = vst.msk [vmem:[#allocation14] sm:$0xff] %vm140, %v418
    // Predicated region
    $region66: #{tpu_custom_call.1} parent=1 // pred_check
      _
    $region67: #{tpu_custom_call.1} parent=1 // pred_check_branch
      %495 = sbr.rel (0) target = $region69
    $region68: #{tpu_custom_call.1} parent=1 // pred_region
      %s497 = ssub.s32 128, 128
      %498 = vsyncadd [#allocation4], %s497
      %s500 = sshll.u32 [#allocation13], 4
      %s501 = int_to_ptr.vmem [resolvable:$true] %s500
      %503 = dma.vmem_to_hbm [thread:$0]  %s501, 128, %s10, [#allocation4]
    $region69: #{tpu_custom_call.1} parent=1 // pred_fallthru
      _
    // Predicated region
    $region70: #{tpu_custom_call.1} parent=1 // pred_check
      _
    $region71: #{tpu_custom_call.1} parent=1 // pred_check_branch
      %505 = sbr.rel (0) target = $region73
    $region72: #{tpu_custom_call.1} parent=1 // pred_region
      %s507 = ssub.s32 128, 128
      %508 = vsyncadd [#allocation15], %s507
      %s510 = sshll.u32 [#allocation14], 4
      %s511 = int_to_ptr.vmem [resolvable:$true] %s510
      %513 = dma.vmem_to_hbm [thread:$0]  %s511, 128, %s11, [#allocation15]
    $region73: #{tpu_custom_call.1} parent=1 // pred_fallthru
      _
    // Predicated region
    $region74: #{tpu_custom_call.1} parent=1 // pred_check
      _
    $region75: #{tpu_custom_call.1} parent=1 // pred_check_branch
      %515 = sbr.rel (0) target = $region77
    $region76: #{tpu_custom_call.1} parent=1 // pred_region
      %516 = dma.done [#allocation4], 128
    $region77: #{tpu_custom_call.1} parent=1 // pred_fallthru
      _
    // Predicated region
    $region78: #{tpu_custom_call.1} parent=1 // pred_check
      _
    $region79: #{tpu_custom_call.1} parent=1 // pred_check_branch
      %518 = sbr.rel (0) target = $region81
    $region80: #{tpu_custom_call.1} parent=1 // pred_region
      %519 = dma.done [#allocation15], 128
    $region81: #{tpu_custom_call.1} parent=1 // pred_fallthru
      _
    %520 = vsyncpa [#allocation3], 1
    %521 = vsyncpa [#allocation6], 1
    %522 = vsyncpa [#allocation9], 1
    %523 = vsyncpa [#allocation12], 1
    %524 = vsyncpa [#allocation4], 1
    %525 = vsyncpa [#allocation15], 1

</llo_original>
